<compile_context>
chip_gen: v7x
topology: tpu7x:2x2x1
jax: 0.10.0
libtpu: 0.0.40
codegen_flags: <defaults>
</compile_context>

<pallas_src>
import functools

import jax
import jax.numpy as jnp
from jax.experimental import pallas as pl
from jax.experimental.pallas import tpu as pltpu

OUT_PAD = 128  # lane-dense padded output width (>= n_actions + 1)


def agent_ac_kernel(x_ref, w1_ref, b1_ref, wh_ref, bh_ref, out_ref, *,
                    n_actions):
    # In-kernel bf16 cast of the activations (VPU work hidden under the
    # pipeline; avoids a separate wrapper-side cast + extra HBM round trip).
    x = x_ref[...].astype(jnp.bfloat16)                       # bf16 [bn, 2H]

    # Fused first layer: columns [0:H) = actor_fc1, [H:2H) = value_fc1.
    # Single MXU pass + single tanh (EUP); f32 accumulate / bias / tanh.
    h = jnp.tanh(
        jnp.dot(x, w1_ref[...], preferred_element_type=jnp.float32)
        + b1_ref[...]
    )                                                         # f32 [bn, 2H]

    # Fused block-diagonal heads padded to OUT_PAD lanes:
    #   z[:, :n_actions]   = actor logits
    #   z[:, n_actions]    = value
    #   z[:, n_actions+1:] = 0 (padding, free on the MXU)
    z = (
        jnp.dot(h.astype(wh_ref.dtype), wh_ref[...],
                preferred_element_type=jnp.float32)
        + bh_ref[...]
    )                                                         # f32 [bn, OUT_PAD]

    # Numerically-stable log-softmax over the actor-logit lanes only,
    # done with masked full-width (128-lane) reductions so no narrow slice /
    # relayout copy is materialized (max/sum on XLU, exp/log on EUP).
    col = jax.lax.broadcasted_iota(jnp.int32, z.shape, dimension=1)
    is_logit = col < n_actions
    zl = jnp.where(is_logit, z, jnp.float32(-jnp.inf))
    m = jnp.max(zl, axis=-1, keepdims=True)
    lse = m + jnp.log(jnp.sum(jnp.exp(zl - m), axis=-1, keepdims=True))

    # Single lane-dense store: subtract lse only from the logit lanes,
    # leaving the value / pad lanes untouched.
    out_ref[...] = (z - jnp.where(is_logit, lse, 0.0)).astype(out_ref.dtype)


def _round_up(v, m):
    return -(-v // m) * m


def _fuse_params(params, n_actions, out_pad=OUT_PAD):
    """Fuse the 4 Linear layers into 2 matmul operand pairs. Call ONCE,
    outside the per-forward path (several HBM-touching XLA ops)."""
    hid = params["wah"].shape[0]
    two_h = params["wa1"].shape[0]
    assert n_actions + 1 <= out_pad, (
        f"n_actions={n_actions} does not fit in OUT_PAD={out_pad} "
        "(value column would be misplaced)")
    assert two_h == 2 * hid, (
        f"expected fc1 input dim == 2*hid_size, got {two_h} vs 2*{hid}")
    assert params["wv1"].shape == (two_h, hid)
    assert params["wvh"].shape == (hid, 1)

    w_fc1 = jnp.concatenate([params["wa1"], params["wv1"]], axis=1)   # [2H, 2H]
    b_fc1 = jnp.concatenate([params["ba1"], params["bv1"]], axis=1)   # [1, 2H]

    w_heads = jnp.zeros((two_h, out_pad), jnp.float32)
    w_heads = w_heads.at[:hid, :n_actions].set(params["wah"])
    w_heads = w_heads.at[hid:, n_actions:n_actions + 1].set(params["wvh"])
    b_heads = jnp.zeros((1, out_pad), jnp.float32)
    b_heads = b_heads.at[:, :n_actions].set(params["bah"])
    b_heads = b_heads.at[:, n_actions:n_actions + 1].set(params["bvh"])

    # bf16 MXU operands; biases stay f32 (added to the f32 accumulator).
    return (w_fc1.astype(jnp.bfloat16), b_fc1,
            w_heads.astype(jnp.bfloat16), b_heads)


def _select_row_block(n):
    """Row block size: whole batch for small N (launch-bound anyway); up to
    2048-row blocks for large N, capped so the grid has >= 2 steps and the
    'parallel' row axis keeps both v7x TensorCores busy."""
    n8 = _round_up(n, 8)
    if n8 <= 256:
        return n8
    return max(8, min(2048, _round_up(pl.cdiv(n8, 2), 8)))


def _agent_ac_forward_impl(x, fused, n_actions, out_dtype):
    w_fc1, b_fc1, w_heads, b_heads = fused
    n, two_h = x.shape

    bn = _select_row_block(n)
    n_pad = _round_up(n, bn)

    x_in = x
    if n_pad != n:
        # Ragged final block: pad with zeros (padded rows produce finite
        # values and are sliced off below).
        x_in = jnp.pad(x_in, ((0, n_pad - n), (0, 0)))

    out = pl.pallas_call(
        functools.partial(agent_ac_kernel, n_actions=n_actions),
        out_shape=jax.ShapeDtypeStruct((n_pad, OUT_PAD), out_dtype),
        grid=(n_pad // bn,),
        in_specs=[
            pl.BlockSpec((bn, two_h), lambda i: (i, 0)),        # x rows (f32)
            pl.BlockSpec((two_h, two_h), lambda i: (0, 0)),     # fused fc1 W
            pl.BlockSpec((1, two_h), lambda i: (0, 0)),         # fused fc1 b
            pl.BlockSpec((two_h, OUT_PAD), lambda i: (0, 0)),   # fused heads W
            pl.BlockSpec((1, OUT_PAD), lambda i: (0, 0)),       # fused heads b
        ],
        out_specs=pl.BlockSpec((bn, OUT_PAD), lambda i: (i, 0)),
        compiler_params=pltpu.CompilerParams(
            dimension_semantics=("parallel",)),                 # v7x 2-TC sharding
    )(x_in, w_fc1, b_fc1, w_heads, b_heads)

    a = out[:n, :n_actions].astype(jnp.float32)
    v = out[:n, n_actions:n_actions + 1].astype(jnp.float32)
    return a, v


def make_agent_ac_forward(params, out_dtype=jnp.float32):
    """Fuse parameters ONCE and return a jitted forward: x -> (log_probs, value).
    out_dtype=jnp.bfloat16 halves the HBM writeback at large N (the kernel is
    output-store bound there) at the cost of bf16 log-prob precision."""
    n_actions = params["wah"].shape[1]
    fused = jax.tree_util.tree_map(jnp.asarray,
                                   _fuse_params(params, n_actions))

    @jax.jit
    def fwd(x):
        return _agent_ac_forward_impl(x, fused, n_actions, out_dtype)

    return fwd


def init_params(key, obs_in, hid_size, n_actions):
    """Deterministic synthetic params. Weights stored already transposed
    to [in, out]; biases as [1, out]."""
    ks = jax.random.split(key, 8)
    s = 0.1

    def w(k, shape):
        return (s * jax.random.normal(k, shape)).astype(jnp.float32)

    return {
        # actor_fc1: Linear(2H -> H)
        "wa1": w(ks[0], (obs_in, hid_size)),
        "ba1": w(ks[1], (1, hid_size)),
        # actor_head: Linear(H -> n_actions)
        "wah": w(ks[2], (hid_size, n_actions)),
        "bah": w(ks[3], (1, n_actions)),
        # value_fc1: Linear(2H -> H)
        "wv1": w(ks[4], (obs_in, hid_size)),
        "bv1": w(ks[5], (1, hid_size)),
        # value_head: Linear(H -> 1)
        "wvh": w(ks[6], (hid_size, 1)),
        "bvh": w(ks[7], (1, 1)),
    }


def reference_forward(x, p):
    """Pure-JAX f32 reference matching the PyTorch forward semantics."""
    h_a = jnp.tanh(x @ p["wa1"] + p["ba1"])
    logits = h_a @ p["wah"] + p["bah"]
    a = jax.nn.log_softmax(logits, axis=-1)
    h_v = jnp.tanh(x @ p["wv1"] + p["bv1"])
    v = h_v @ p["wvh"] + p["bvh"]
    return a, v


if __name__ == "__main__":
    # Small shapes consistent with the module: block == 'no' so the forward
    # input dim is hid_size * 2.
    n_agents = 8
    hid_size = 32
    n_actions = 10
    obs_in = hid_size * 2

    key = jax.random.PRNGKey(0)
    k_x, k_p, k_x2 = jax.random.split(key, 3)

    params = init_params(k_p, obs_in, hid_size, n_actions)
    fwd = make_agent_ac_forward(params)   # params fused once, outside hot path

    def check(x):
        a, v = jax.block_until_ready(fwd(x))
        a_ref, v_ref = reference_forward(x, params)
        assert a.shape == (x.shape[0], n_actions)
        assert v.shape == (x.shape[0], 1)
        # bf16 MXU operands (f32 accumulation) vs the pure-f32 reference:
        # tolerance covers bf16 input rounding at these magnitudes.
        assert jnp.allclose(a, a_ref, atol=5e-2), "actor log-probs mismatch"
        assert jnp.allclose(v, v_ref, atol=5e-2), "value mismatch"
        # structural check: log-softmax rows must normalize
        assert jnp.allclose(jnp.sum(jnp.exp(a), axis=-1), 1.0, atol=1e-3), \
            "log-softmax rows not normalized"

    # Shipped tiny-agent case (single block; launch-bound).
    # TODO(synk): at N<=128 the right optimization is fusing with the producer
    # of `after_comm` (comm matmul) or batching env steps into the row dim.
    x_small = jax.random.normal(k_x, (n_agents, obs_in), dtype=jnp.float32)
    check(x_small)

    # Larger batch exercising the multi-block path (grid >= 2, ragged pad).
    x_big = jax.random.normal(k_x2, (300, obs_in), dtype=jnp.float32)
    check(x_big)

    print("KERNEL_OK")
</pallas_src>

<mosaic_0001>
module attributes {stable_mosaic.version = 11 : i64} {
  func.func @agent_ac_kernel(%arg0: i32, %arg1: memref<8x64xf32, #tpu.memory_space<vmem>>, %arg2: memref<64x64xbf16, #tpu.memory_space<vmem>>, %arg3: memref<1x64xf32, #tpu.memory_space<vmem>>, %arg4: memref<64x128xbf16, #tpu.memory_space<vmem>>, %arg5: memref<1x128xf32, #tpu.memory_space<vmem>>, %arg6: memref<8x128xf32, #tpu.memory_space<vmem>>) attributes {dimension_semantics = [#tpu.dimension_semantics<parallel>], iteration_bounds = array<i64: 1>, scalar_prefetch = 0 : i64, scratch_operands = 0 : i64, tpu.core_type = #tpu.core_type<tc>, window_params = [{transform_indices = @transform_0, window_bounds = array<i64: 8, 64>}, {pipeline_mode = #tpu.pipeline_mode<synchronous>, transform_indices = @transform_1, window_bounds = array<i64: 64, 64>}, {pipeline_mode = #tpu.pipeline_mode<synchronous>, transform_indices = @transform_2, window_bounds = array<i64: 1, 64>}, {pipeline_mode = #tpu.pipeline_mode<synchronous>, transform_indices = @transform_3, window_bounds = array<i64: 64, 128>}, {pipeline_mode = #tpu.pipeline_mode<synchronous>, transform_indices = @transform_4, window_bounds = array<i64: 1, 128>}, {transform_indices = @transform_5, window_bounds = array<i64: 8, 128>}]} {
    %c0 = arith.constant 0 : index
    %c0_0 = arith.constant 0 : index
    %0 = vector.load %arg1[%c0, %c0_0] : memref<8x64xf32, #tpu.memory_space<vmem>>, vector<8x64xf32>
    %1 = arith.truncf %0 : vector<8x64xf32> to vector<8x64xbf16>
    %c0_1 = arith.constant 0 : index
    %c0_2 = arith.constant 0 : index
    %2 = vector.load %arg2[%c0_1, %c0_2] : memref<64x64xbf16, #tpu.memory_space<vmem>>, vector<64x64xbf16>
    %cst = arith.constant dense<0.000000e+00> : vector<8x64xf32>
    %3 = tpu.matmul %1, %2, %cst {dimension_numbers = #tpu.dot_dimension_numbers<[1], [0], [0], [1], [0, 0, 1, 1], [], []>} : vector<8x64xbf16>, vector<64x64xbf16>, vector<8x64xf32> -> vector<8x64xf32>
    %c0_3 = arith.constant 0 : index
    %c0_4 = arith.constant 0 : index
    %4 = vector.load %arg3[%c0_3, %c0_4] : memref<1x64xf32, #tpu.memory_space<vmem>>, vector<1x64xf32>
    %5 = vector.broadcast %4 : vector<1x64xf32> to vector<8x64xf32>
    %6 = arith.addf %3, %5 : vector<8x64xf32>
    %7 = math.tanh %6 : vector<8x64xf32>
    %8 = arith.truncf %7 : vector<8x64xf32> to vector<8x64xbf16>
    %c0_5 = arith.constant 0 : index
    %c0_6 = arith.constant 0 : index
    %9 = vector.load %arg4[%c0_5, %c0_6] : memref<64x128xbf16, #tpu.memory_space<vmem>>, vector<64x128xbf16>
    %cst_7 = arith.constant dense<0.000000e+00> : vector<8x128xf32>
    %10 = tpu.matmul %8, %9, %cst_7 {dimension_numbers = #tpu.dot_dimension_numbers<[1], [0], [0], [1], [0, 0, 1, 1], [], []>} : vector<8x64xbf16>, vector<64x128xbf16>, vector<8x128xf32> -> vector<8x128xf32>
    %c0_8 = arith.constant 0 : index
    %c0_9 = arith.constant 0 : index
    %11 = vector.load %arg5[%c0_8, %c0_9] : memref<1x128xf32, #tpu.memory_space<vmem>>, vector<1x128xf32>
    %12 = vector.broadcast %11 : vector<1x128xf32> to vector<8x128xf32>
    %13 = arith.addf %10, %12 : vector<8x128xf32>
    %14 = tpu.iota {dimensions = array<i32: 1>} : vector<8x128xi32>
    %c10_i32 = arith.constant 10 : i32
    %15 = vector.broadcast %c10_i32 : i32 to vector<8x128xi32>
    %16 = arith.cmpi slt, %14, %15 : vector<8x128xi32>
    %cst_10 = arith.constant 0xFF800000 : f32
    %17 = vector.broadcast %cst_10 : f32 to vector<8x128xf32>
    %18 = arith.select %16, %13, %17 : vector<8x128xi1>, vector<8x128xf32>
    %cst_11 = arith.constant dense<0xFF800000> : vector<8xf32>
    %19 = vector.multi_reduction <maximumf>, %18, %cst_11 [1] : vector<8x128xf32> to vector<8xf32>
    %20 = vector.shape_cast %19 : vector<8xf32> to vector<8x1xf32>
    %21 = vector.broadcast %20 : vector<8x1xf32> to vector<8x128xf32>
    %22 = arith.subf %18, %21 : vector<8x128xf32>
    %23 = math.exp %22 : vector<8x128xf32>
    %cst_12 = arith.constant dense<0.000000e+00> : vector<8xf32>
    %24 = vector.multi_reduction <add>, %23, %cst_12 [1] : vector<8x128xf32> to vector<8xf32>
    %25 = vector.shape_cast %24 : vector<8xf32> to vector<8x1xf32>
    %26 = math.log %25 : vector<8x1xf32>
    %27 = arith.addf %20, %26 : vector<8x1xf32>
    %cst_13 = arith.constant 0.000000e+00 : f32
    %28 = vector.shape_cast %27 : vector<8x1xf32> to vector<8x1xf32>
    %29 = vector.broadcast %28 : vector<8x1xf32> to vector<8x128xf32>
    %30 = vector.broadcast %cst_13 : f32 to vector<8x128xf32>
    %31 = arith.select %16, %29, %30 : vector<8x128xi1>, vector<8x128xf32>
    %32 = arith.subf %13, %31 : vector<8x128xf32>
    %c0_14 = arith.constant 0 : index
    %c0_15 = arith.constant 0 : index
    %33 = vector.load %arg6[%c0_14, %c0_15] : memref<8x128xf32, #tpu.memory_space<vmem>>, vector<8x128xf32>
    tpu.vector_store %arg6[%c0_14, %c0_15], %32 {strides = array<i32>} : memref<8x128xf32, #tpu.memory_space<vmem>>, vector<8x128xf32>,
    return
  }
  func.func @transform_0(%arg0: i32) -> (i32, i32) {
    %c0_i32 = arith.constant 0 : i32
    %c0_i32_0 = arith.constant 0 : i32
    return %arg0, %c0_i32 : i32, i32
  }
  func.func @transform_1(%arg0: i32) -> (i32, i32) {
    %c0_i32 = arith.constant 0 : i32
    %c0_i32_0 = arith.constant 0 : i32
    %c0_i32_1 = arith.constant 0 : i32
    return %c0_i32, %c0_i32_0 : i32, i32
  }
  func.func @transform_2(%arg0: i32) -> (i32, i32) {
    %c0_i32 = arith.constant 0 : i32
    %c0_i32_0 = arith.constant 0 : i32
    %c0_i32_1 = arith.constant 0 : i32
    return %c0_i32, %c0_i32_0 : i32, i32
  }
  func.func @transform_3(%arg0: i32) -> (i32, i32) {
    %c0_i32 = arith.constant 0 : i32
    %c0_i32_0 = arith.constant 0 : i32
    %c0_i32_1 = arith.constant 0 : i32
    return %c0_i32, %c0_i32_0 : i32, i32
  }
  func.func @transform_4(%arg0: i32) -> (i32, i32) {
    %c0_i32 = arith.constant 0 : i32
    %c0_i32_0 = arith.constant 0 : i32
    %c0_i32_1 = arith.constant 0 : i32
    return %c0_i32, %c0_i32_0 : i32, i32
  }
  func.func @transform_5(%arg0: i32) -> (i32, i32) {
    %c0_i32 = arith.constant 0 : i32
    %c0_i32_0 = arith.constant 0 : i32
    return %arg0, %c0_i32 : i32, i32
  }
}

</mosaic_0001>

<llo_original>
// kernel: fwd.1
$region0: #{fwd.1}
  #allocation0 [shape = 'u32[]', space=smem, size = 0x4, offset = 0x4, fixed_abs, tag = 'smem constant byte address 0x4 - core index']
  #allocation1 [shape = 'u32[144,128]{1,0:T(1,128)}', space=vmem, size = 0x12000, scoped, tag = 'internal scratch']
  %s0 = inlined_call_operand.hbm [shape: f32[8,64], index: 0, kind: input, shape index: {}]
  %s1 = inlined_call_operand.hbm [shape: bf16[64,64], index: 1, kind: input, shape index: {}]
  %s2 = inlined_call_operand.vmem [shape: f32[1,64], index: 2, kind: input, shape index: {}]
  %s3 = inlined_call_operand.hbm [shape: bf16[64,128], index: 3, kind: input, shape index: {}]
  %s4 = inlined_call_operand.vmem [shape: f32[1,128], index: 4, kind: input, shape index: {}]
  %s5 = inlined_call_operand.vmem [shape: f32[8,128], index: 5, kind: output, shape index: {}]
  %s6 = sld [smem:[#allocation0]]
  $region42: #{fwd.1} parent=0
    _
  %s8 = ssub.s32 1, %s6
  %s9 = scalar_select 0, %s8, %s6
  $region1: #{fwd.1} parent=0
    #allocation2 [shape = 'u8[4096]{0}', space=vmem, size = 0x1000, scoped, tag = 'input window, operand 0, single buffered']
    #allocation3 [shape = 's32[1]{0}', space=sflag, size = 0x4, scoped, tag = 'scoped memory for fwd.1']
    #allocation4 [shape = 'u8[16384]{0}', space=vmem, size = 0x4000, scoped, tag = 'input window, operand 1, single buffered']
    #allocation5 [shape = 's32[1]{0}', space=sflag, size = 0x4, scoped, tag = 'scoped memory for fwd.1']
    #allocation6 [shape = 'u8[16384]{0}', space=vmem, size = 0x4000, scoped, tag = 'input window, operand 3, single buffered']
    %10 = vsyncpa [#allocation3], 0
    %11 = vsyncpa [#allocation5], 0
    // Predicated region
    $region2: #{fwd.1} parent=1 // pred_check
      _
    $region3: #{fwd.1} parent=1 // pred_check_branch
      %13 = sbr.rel (0) target = $region5
    $region4: #{fwd.1} parent=1 // pred_region
      %s15 = ssub.s32 128, 128
      %16 = vsyncadd [#allocation3], %s15
      %s18 = sshll.u32 [#allocation2], 4
      %s19 = int_to_ptr.vmem [resolvable:$true] %s18
      %21 = dma.hbm_to_vmem [thread:$0]  %s0, 128, %s19, [#allocation3]
    $region5: #{fwd.1} parent=1 // pred_fallthru
      _
    // Predicated region
    $region6: #{fwd.1} parent=1 // pred_check
      _
    $region7: #{fwd.1} parent=1 // pred_check_branch
      %23 = sbr.rel (0) target = $region9
    $region8: #{fwd.1} parent=1 // pred_region
      %s25 = ssub.s32 512, 512
      %26 = vsyncadd [#allocation5], %s25
      %s27 = sshll.u32 [#allocation4], 4
      %s28 = int_to_ptr.vmem [resolvable:$true] %s27
      %33 = dma.hbm_to_vmem [thread:$0]  %s1, 512, %s28, [#allocation5], 64, 64, 4
    $region9: #{fwd.1} parent=1 // pred_fallthru
      _
    // Predicated region
    $region10: #{fwd.1} parent=1 // pred_check
      _
    $region11: #{fwd.1} parent=1 // pred_check_branch
      %35 = sbr.rel (0) target = $region13
    $region12: #{fwd.1} parent=1 // pred_region
      _
    $region13: #{fwd.1} parent=1 // pred_fallthru
      _
    // Predicated region
    $region14: #{fwd.1} parent=1 // pred_check
      _
    $region15: #{fwd.1} parent=1 // pred_check_branch
      %37 = sbr.rel (0) target = $region17
    $region16: #{fwd.1} parent=1 // pred_region
      %s39 = ssub.s32 512, 512
      %40 = vsyncadd [#allocation5], %s39
      %s41 = sshll.u32 [#allocation6], 4
      %s42 = int_to_ptr.vmem [resolvable:$true] %s41
      %47 = dma.hbm_to_vmem [thread:$0]  %s3, 512, %s42, [#allocation5], 64, 64, 4
    $region17: #{fwd.1} parent=1 // pred_fallthru
      _
    // Predicated region
    $region18: #{fwd.1} parent=1 // pred_check
      _
    $region19: #{fwd.1} parent=1 // pred_check_branch
      %49 = sbr.rel (0) target = $region21
    $region20: #{fwd.1} parent=1 // pred_region
      _
    $region21: #{fwd.1} parent=1 // pred_fallthru
      _
    // Predicated region
    $region22: #{fwd.1} parent=1 // pred_check
      _
    $region23: #{fwd.1} parent=1 // pred_check_branch
      %51 = sbr.rel (0) target = $region25
    $region24: #{fwd.1} parent=1 // pred_region
      %52 = dma.done [#allocation3], 128
    $region25: #{fwd.1} parent=1 // pred_fallthru
      _
    // Predicated region
    $region26: #{fwd.1} parent=1 // pred_check
      _
    $region27: #{fwd.1} parent=1 // pred_check_branch
      %54 = sbr.rel (0) target = $region29
    $region28: #{fwd.1} parent=1 // pred_region
      %55 = dma.done [#allocation5], 512
    $region29: #{fwd.1} parent=1 // pred_fallthru
      _
    // Predicated region
    $region30: #{fwd.1} parent=1 // pred_check
      _
    $region31: #{fwd.1} parent=1 // pred_check_branch
      %57 = sbr.rel (0) target = $region33
    $region32: #{fwd.1} parent=1 // pred_region
      %58 = dma.done [#allocation5], 512
    $region33: #{fwd.1} parent=1 // pred_fallthru
      _
    %v60 = vld [vmem:[#allocation2] sm:$0xff]
    %v61 = vpack.c.bf16 %v60, %v60
    %v62 = vld [vmem:[#allocation4] sm:$0xf]
    %v63 = vld [vmem:[#allocation4 + $0x4] sm:$0xf]
    %v64 = vld [vmem:[#allocation4 + $0x8] sm:$0xf]
    %v65 = vld [vmem:[#allocation4 + $0xc] sm:$0xf]
    %v66 = vld [vmem:[#allocation4 + $0x10] sm:$0xf]
    %v67 = vld [vmem:[#allocation4 + $0x14] sm:$0xf]
    %v68 = vld [vmem:[#allocation4 + $0x18] sm:$0xf]
    %v69 = vld [vmem:[#allocation4 + $0x1c] sm:$0xf]
    %v70 = vld [vmem:[%s2] sm:$0x1]
    %v72 = vlaneseq
    %v73 = vshrl.u32 %v72, 7
    %v74 = vsub.s32 0, %v73
    %v75 = vrot.slane %v70, %v74
    %v85 = vunpack.c.l.b16 %v62
    %v86 = vunpack.c.l.b16 %v63
    %v87 = vunpack.c.l.b16 %v64
    %v88 = vunpack.c.l.b16 %v65
    %v89 = vunpack.c.l.b16 %v66
    %v90 = vunpack.c.l.b16 %v67
    %v91 = vunpack.c.l.b16 %v68
    %v92 = vunpack.c.l.b16 %v69
    %v93 = vpack.c.b16 %v86, %v85
    %v94 = vpack.c.b16 %v88, %v87
    %v95 = vpack.c.b16 %v90, %v89
    %v96 = vpack.c.b16 %v92, %v91
    %vm101 = vcmask 523264
    %v103 = vsel %vm101, %v61, 0
    %105 = vmatprep.subr.bf16.mxu0 0
    %106 = vmatpush1.bf16.msra.mxu0 %v93
    %107 = vmatprep.subr.bf16.mxu0 0
    %108 = vmatpush1.bf16.msra.mxu0 %v94
    %109 = vmatprep.subr.bf16.mxu0 0
    %110 = vmatpush1.bf16.msra.mxu0 %v95
    %111 = vmatprep.subr.bf16.mxu0 0
    %112 = vmatpush1.bf16.msra.mxu0 %v96
    %113 = vmatprep.subr.bf16.mxu0 0
    %114 = vmatpush1.bf16.msra.mxu0 0
    %115 = vmatprep.subr.bf16.mxu0 0
    %116 = vmatpush1.bf16.msra.mxu0 0
    %117 = vmatprep.subr.bf16.mxu0 0
    %118 = vmatpush1.bf16.msra.mxu0 0
    %119 = vmatprep.subr.bf16.mxu0 0
    %120 = vmatpush1.bf16.msra.mxu0 0
    %121 = vmatprep.subr.bf16.mxu0 0
    %122 = vmatpush1.bf16.msra.mxu0 0
    %123 = vmatprep.subr.bf16.mxu0 0
    %124 = vmatpush1.bf16.msra.mxu0 0
    %125 = vmatprep.subr.bf16.mxu0 0
    %126 = vmatpush1.bf16.msra.mxu0 0
    %127 = vmatprep.subr.bf16.mxu0 0
    %128 = vmatpush1.bf16.msra.mxu0 0
    %129 = vmatprep.subr.bf16.mxu0 0
    %130 = vmatpush1.bf16.msra.mxu0 0
    %131 = vmatprep.subr.bf16.mxu0 0
    %132 = vmatpush1.bf16.msra.mxu0 0
    %133 = vmatprep.subr.bf16.mxu0 0
    %134 = vmatpush1.bf16.msra.mxu0 0
    %135 = vmatprep.subr.bf16.mxu0 0
    %136 = vmatpush1.bf16.msra.mxu0 0
    %137 = vmatprep.mubr.bf16.mxu0 0
    %138 = vmatmul.mubr.bf16.gmra.mrb[0].mxu0 %v103
    %v139 = vpop.f32.mrb[0].mxu0
    %v140 = vadd.f32 %v75, %v139
    %v141 = vpop.f32.mrb[0].mxu0
    %v142 = vpop.f32.mrb[0].mxu0
    %v143 = vpop.f32.mrb[0].mxu0
    %144 = vdwg.mxu0
    %v145 = vtanh.pop %v140
    %v146 = vpack.c.bf16 %v145, %v145
    %v147 = vld [vmem:[#allocation6] sm:$0xf]
    %v148 = vld [vmem:[#allocation6 + $0x4] sm:$0xf]
    %v149 = vld [vmem:[#allocation6 + $0x8] sm:$0xf]
    %v150 = vld [vmem:[#allocation6 + $0xc] sm:$0xf]
    %v151 = vld [vmem:[#allocation6 + $0x10] sm:$0xf]
    %v152 = vld [vmem:[#allocation6 + $0x14] sm:$0xf]
    %v153 = vld [vmem:[#allocation6 + $0x18] sm:$0xf]
    %v154 = vld [vmem:[#allocation6 + $0x1c] sm:$0xf]
    %v155 = vld [vmem:[%s4] sm:$0x1]
    %v157 = vlaneseq
    %v158 = vshrl.u32 %v157, 7
    %v159 = vsub.s32 0, %v158
    %v160 = vrot.slane %v155, %v159
    %v170 = vunpack.c.l.b16 %v147
    %v171 = vunpack.c.l.b16 %v148
    %v172 = vunpack.c.l.b16 %v149
    %v173 = vunpack.c.l.b16 %v150
    %v174 = vunpack.c.l.b16 %v151
    %v175 = vunpack.c.l.b16 %v152
    %v176 = vunpack.c.l.b16 %v153
    %v177 = vunpack.c.l.b16 %v154
    %v178 = vpack.c.b16 %v171, %v170
    %v179 = vpack.c.b16 %v173, %v172
    %v180 = vpack.c.b16 %v175, %v174
    %v181 = vpack.c.b16 %v177, %v176
    %v187 = vsel %vm101, %v146, 0
    %189 = vmatprep.subr.bf16.mxu0 0
    %190 = vmatpush1.bf16.msra.mxu0 %v178
    %191 = vmatprep.subr.bf16.mxu0 0
    %192 = vmatpush1.bf16.msra.mxu0 %v179
    %193 = vmatprep.subr.bf16.mxu0 0
    %194 = vmatpush1.bf16.msra.mxu0 %v180
    %195 = vmatprep.subr.bf16.mxu0 0
    %196 = vmatpush1.bf16.msra.mxu0 %v181
    %197 = vmatprep.subr.bf16.mxu0 0
    %198 = vmatpush1.bf16.msra.mxu0 0
    %199 = vmatprep.subr.bf16.mxu0 0
    %200 = vmatpush1.bf16.msra.mxu0 0
    %201 = vmatprep.subr.bf16.mxu0 0
    %202 = vmatpush1.bf16.msra.mxu0 0
    %203 = vmatprep.subr.bf16.mxu0 0
    %204 = vmatpush1.bf16.msra.mxu0 0
    %205 = vmatprep.subr.bf16.mxu0 0
    %206 = vmatpush1.bf16.msra.mxu0 0
    %207 = vmatprep.subr.bf16.mxu0 0
    %208 = vmatpush1.bf16.msra.mxu0 0
    %209 = vmatprep.subr.bf16.mxu0 0
    %210 = vmatpush1.bf16.msra.mxu0 0
    %211 = vmatprep.subr.bf16.mxu0 0
    %212 = vmatpush1.bf16.msra.mxu0 0
    %213 = vmatprep.subr.bf16.mxu0 0
    %214 = vmatpush1.bf16.msra.mxu0 0
    %215 = vmatprep.subr.bf16.mxu0 0
    %216 = vmatpush1.bf16.msra.mxu0 0
    %217 = vmatprep.subr.bf16.mxu0 0
    %218 = vmatpush1.bf16.msra.mxu0 0
    %219 = vmatprep.subr.bf16.mxu0 0
    %220 = vmatpush1.bf16.msra.mxu0 0
    %221 = vmatprep.mubr.bf16.mxu0 0
    %222 = vmatmul.mubr.bf16.gmra.mrb[0].mxu0 %v187
    %v223 = vpop.f32.mrb[0].mxu0
    %v224 = vadd.f32 %v160, %v223
    %v225 = vpop.f32.mrb[0].mxu0
    %v226 = vpop.f32.mrb[0].mxu0
    %v227 = vpop.f32.mrb[0].mxu0
    %228 = vdwg.mxu0
    %v229 = vlaneseq
    %v230 = vand.u32 %v229, 127
    %vm231 = vcmp.lt.s32.totalorder %v230, 10
    %v232 = vsel %vm231, %v224, -inf
    %233 = vmax.xlane.f32.xlu0 %v232
    %v234 = vpop.xlane.xlu0 %233
    %v235 = vsub.f32 %v232, %v234
    %v236 = vmul.f32 %v235, 1.442695
    %v237 = vpow.pop %v236
    %238 = vadd.xlane.f32.xlu0 %v237
    %v239 = vpop.xlane.xlu0 %238
    %v240 = vlog2.pop %v239
    %v241 = vmul.f32 %v240, 0.6931472
    %v242 = vadd.f32 %v234, %v241
    %v243 = vsel %vm231, %v242, 0.0
    %v244 = vsub.f32 %v224, %v243
    %245 = vst [vmem:[%s5] sm:$0xff] %v244
    // Predicated region
    $region34: #{fwd.1} parent=1 // pred_check
      _
    $region35: #{fwd.1} parent=1 // pred_check_branch
      %247 = sbr.rel (0) target = $region37
    $region36: #{fwd.1} parent=1 // pred_region
      _
    $region37: #{fwd.1} parent=1 // pred_fallthru
      _
    // Predicated region
    $region38: #{fwd.1} parent=1 // pred_check
      _
    $region39: #{fwd.1} parent=1 // pred_check_branch
      %249 = sbr.rel (0) target = $region41
    $region40: #{fwd.1} parent=1 // pred_region
      _
    $region41: #{fwd.1} parent=1 // pred_fallthru
      _
    %250 = vsyncpa [#allocation3], 1
    %251 = vsyncpa [#allocation5], 1

</llo_original>
